<compile_context>
chip_gen: v7x
topology: tpu7x:2x2x1
jax: 0.10.0
libtpu: 0.0.40
codegen_flags: <defaults>
</compile_context>

<pallas_src>
import functools

import jax
import jax.numpy as jnp
from jax.experimental import pallas as pl
from jax.experimental.pallas import tpu as pltpu


def _round_up(x: int, m: int) -> int:
    return (x + m - 1) // m * m


def _cdiv(a: int, b: int) -> int:
    return (a + b - 1) // b


def _choose_tile(batch: int, batch_tile: int) -> int:
    """Pick a batch tile: as large as requested, multiple of 8, and (for large
    batches) small enough that the parallel grid axis has >= 2 steps so both
    TensorCores of a dual-TC chip (v7x) get work."""
    tile = min(_round_up(batch_tile, 8), _round_up(batch, 8))
    if _cdiv(batch, tile) < 2 and batch >= 256:
        tile = max(8, _round_up(_cdiv(batch, 2), 8))
    return tile


def _mlp_kernel(x_ref, w1_ref, b1_ref, w2_ref, b2_ref, w3_ref, b3_ref, o_ref):
    # Fully fused 3-layer MLP on one batch tile. Matmul inputs are in the
    # storage dtype (bf16 by default) -> MXU-native path; accumulation, bias
    # add and ReLU are f32.
    cdt = x_ref.dtype
    x = x_ref[...]

    h1 = jnp.dot(x, w1_ref[...], preferred_element_type=jnp.float32) + b1_ref[...]
    h1 = jnp.maximum(h1, 0.0).astype(cdt)

    h2 = jnp.dot(h1, w2_ref[...], preferred_element_type=jnp.float32) + b2_ref[...]
    h2 = jnp.maximum(h2, 0.0).astype(cdt)

    out = jnp.dot(h2, w3_ref[...], preferred_element_type=jnp.float32) + b3_ref[...]
    o_ref[...] = out.astype(o_ref.dtype)


@functools.partial(jax.jit, static_argnames=("batch_tile", "compute_dtype"))
def observation_model_forward(state, params, *, batch_tile=512,
                              compute_dtype=jnp.bfloat16):
    """Forward pass p(o_t | s_t) mean: MLP(state).

    state:  [B, state_dim] float32
    params: dict with w1 [S,H], b1 [1,H], w2 [H,H], b2 [1,H], w3 [H,O], b3 [1,O]
    returns [B, observation_dim] in state.dtype
    """
    w1, b1 = params["w1"], params["b1"]
    w2, b2 = params["w2"], params["b2"]
    w3, b3 = params["w3"], params["b3"]

    out_dtype = state.dtype
    B, S = state.shape
    H = w1.shape[1]
    O = w3.shape[1]

    tile = _choose_tile(B, batch_tile)
    Bp = _round_up(B, tile)
    if Bp != B:
        state = jnp.pad(state, ((0, Bp - B), (0, 0)))

    # Storage/MXU-input dtype: bf16 halves the streamed HBM bytes and hits the
    # bf16-native MXU path on all generations. Biases stay f32 (VPU adds in f32).
    x = state.astype(compute_dtype)
    w1c, w2c, w3c = (w.astype(compute_dtype) for w in (w1, w2, w3))
    b1f, b2f, b3f = (b.astype(jnp.float32) for b in (b1, b2, b3))

    grid = (Bp // tile,)

    in_bytes = jnp.dtype(compute_dtype).itemsize
    out_bytes = jnp.dtype(out_dtype).itemsize
    cost = pl.CostEstimate(
        flops=2 * Bp * (S * H + H * H + H * O),
        transcendentals=0,
        bytes_accessed=(Bp * S * in_bytes            # streamed activations in
                        + Bp * O * out_bytes         # streamed output
                        + (S * H + H * H + H * O) * in_bytes   # weights
                        + (2 * H + O) * 4),                    # biases
    )

    # Weights/biases use their full extents as the block shape (resident in
    # VMEM across the whole grid); only the batch axis of the activations is
    # tiled and streamed.
    def full(shape):
        return pl.BlockSpec(shape, lambda i: (0, 0))

    out = pl.pallas_call(
        _mlp_kernel,
        out_shape=jax.ShapeDtypeStruct((Bp, O), out_dtype),
        grid_spec=pltpu.PrefetchScalarGridSpec(
            num_scalar_prefetch=0,
            grid=grid,
            in_specs=[
                pl.BlockSpec((tile, S), lambda i: (i, 0)),  # state tile
                full(w1c.shape), full(b1f.shape),
                full(w2c.shape), full(b2f.shape),
                full(w3c.shape), full(b3f.shape),
            ],
            out_specs=pl.BlockSpec((tile, O), lambda i: (i, 0)),
        ),
        compiler_params=pltpu.CompilerParams(
            dimension_semantics=("parallel",),
        ),
        cost_estimate=cost,
    )(x, w1c, b1f, w2c, b2f, w3c, b3f)

    return out[:B] if Bp != B else out


def init_params(key, state_dim, observation_dim, hidden_dim=None):
    """Deterministic synthetic init (shapes match the nn.Linear layers)."""
    hidden_dim = hidden_dim if hidden_dim is not None else state_dim * 2
    k1, k2, k3, k4, k5, k6 = jax.random.split(key, 6)

    def lin(kw, kb, fan_in, fan_out):
        bound = 1.0 / jnp.sqrt(fan_in)
        w = jax.random.uniform(kw, (fan_in, fan_out), jnp.float32, -bound, bound)
        b = jax.random.uniform(kb, (1, fan_out), jnp.float32, -bound, bound)
        return w, b

    w1, b1 = lin(k1, k2, state_dim, hidden_dim)
    w2, b2 = lin(k3, k4, hidden_dim, hidden_dim)
    w3, b3 = lin(k5, k6, hidden_dim, observation_dim)
    return {"w1": w1, "b1": b1, "w2": w2, "b2": b2, "w3": w3, "b3": b3}


def _reference_f32(state, p):
    h1 = jnp.maximum(state @ p["w1"] + p["b1"], 0.0)
    h2 = jnp.maximum(h1 @ p["w2"] + p["b2"], 0.0)
    return h2 @ p["w3"] + p["b3"]


def _reference_matched(state, p, compute_dtype=jnp.bfloat16):
    # Same bf16-in / f32-accumulate casting scheme as the kernel.
    cdt = compute_dtype
    h1 = jnp.dot(state.astype(cdt), p["w1"].astype(cdt),
                 preferred_element_type=jnp.float32) + p["b1"]
    h1 = jnp.maximum(h1, 0.0)
    h2 = jnp.dot(h1.astype(cdt), p["w2"].astype(cdt),
                 preferred_element_type=jnp.float32) + p["b2"]
    h2 = jnp.maximum(h2, 0.0)
    return jnp.dot(h2.astype(cdt), p["w3"].astype(cdt),
                   preferred_element_type=jnp.float32) + p["b3"]


if __name__ == "__main__":
    state_dim = 16
    observation_dim = 24
    hidden_dim = None  # defaults to state_dim * 2 = 32, as in the module

    key = jax.random.PRNGKey(0)
    k_params, k_small, k_big = jax.random.split(key, 3)
    params = init_params(k_params, state_dim, observation_dim, hidden_dim)

    # Small-shape primary check.
    batch = 8
    state_small = jax.random.normal(k_small, (batch, state_dim), jnp.float32)
    out_small = jax.block_until_ready(observation_model_forward(state_small, params))
    assert out_small.shape == (batch, observation_dim)
    ref_m = _reference_matched(state_small, params)
    ref_f = _reference_f32(state_small, params)
    assert jnp.allclose(out_small, ref_m, atol=1e-2, rtol=1e-2), "mismatch vs bf16 reference"
    assert jnp.allclose(out_small, ref_f, atol=5e-2, rtol=5e-2), "mismatch vs f32 reference"

    # Larger batch: exercises batch padding (1000 -> 1024) and a 2-step parallel grid.
    batch_big = 1000
    state_big = jax.random.normal(k_big, (batch_big, state_dim), jnp.float32)
    out_big = jax.block_until_ready(observation_model_forward(state_big, params))
    assert out_big.shape == (batch_big, observation_dim)
    assert jnp.allclose(out_big, _reference_matched(state_big, params),
                        atol=1e-2, rtol=1e-2), "mismatch (large batch) vs bf16 reference"

    print("KERNEL_OK")
</pallas_src>

<mosaic_0001>
module attributes {stable_mosaic.version = 11 : i64} {
  func.func @_mlp_kernel(%arg0: i32, %arg1: memref<8x16xbf16, #tpu.memory_space<vmem>>, %arg2: memref<16x32xbf16, #tpu.memory_space<vmem>>, %arg3: memref<1x32xf32, #tpu.memory_space<vmem>>, %arg4: memref<32x32xbf16, #tpu.memory_space<vmem>>, %arg5: memref<1x32xf32, #tpu.memory_space<vmem>>, %arg6: memref<32x24xbf16, #tpu.memory_space<vmem>>, %arg7: memref<1x24xf32, #tpu.memory_space<vmem>>, %arg8: memref<8x24xf32, #tpu.memory_space<vmem>>) attributes {dimension_semantics = [#tpu.dimension_semantics<parallel>], iteration_bounds = array<i64: 1>, scalar_prefetch = 0 : i64, scratch_operands = 0 : i64, tpu.core_type = #tpu.core_type<tc>, window_params = [{transform_indices = @transform_0, window_bounds = array<i64: 8, 16>}, {pipeline_mode = #tpu.pipeline_mode<synchronous>, transform_indices = @transform_1, window_bounds = array<i64: 16, 32>}, {pipeline_mode = #tpu.pipeline_mode<synchronous>, transform_indices = @transform_2, window_bounds = array<i64: 1, 32>}, {pipeline_mode = #tpu.pipeline_mode<synchronous>, transform_indices = @transform_3, window_bounds = array<i64: 32, 32>}, {pipeline_mode = #tpu.pipeline_mode<synchronous>, transform_indices = @transform_4, window_bounds = array<i64: 1, 32>}, {pipeline_mode = #tpu.pipeline_mode<synchronous>, transform_indices = @transform_5, window_bounds = array<i64: 32, 24>}, {pipeline_mode = #tpu.pipeline_mode<synchronous>, transform_indices = @transform_6, window_bounds = array<i64: 1, 24>}, {transform_indices = @transform_7, window_bounds = array<i64: 8, 24>}]} {
    %c0 = arith.constant 0 : index
    %c0_0 = arith.constant 0 : index
    %0 = vector.load %arg1[%c0, %c0_0] : memref<8x16xbf16, #tpu.memory_space<vmem>>, vector<8x16xbf16>
    %c0_1 = arith.constant 0 : index
    %c0_2 = arith.constant 0 : index
    %1 = vector.load %arg2[%c0_1, %c0_2] : memref<16x32xbf16, #tpu.memory_space<vmem>>, vector<16x32xbf16>
    %cst = arith.constant dense<0.000000e+00> : vector<8x32xf32>
    %2 = tpu.matmul %0, %1, %cst {dimension_numbers = #tpu.dot_dimension_numbers<[1], [0], [0], [1], [0, 0, 1, 1], [], []>} : vector<8x16xbf16>, vector<16x32xbf16>, vector<8x32xf32> -> vector<8x32xf32>
    %c0_3 = arith.constant 0 : index
    %c0_4 = arith.constant 0 : index
    %3 = vector.load %arg3[%c0_3, %c0_4] : memref<1x32xf32, #tpu.memory_space<vmem>>, vector<1x32xf32>
    %4 = vector.broadcast %3 : vector<1x32xf32> to vector<8x32xf32>
    %5 = arith.addf %2, %4 : vector<8x32xf32>
    %cst_5 = arith.constant 0.000000e+00 : f32
    %6 = vector.broadcast %cst_5 : f32 to vector<8x32xf32>
    %7 = arith.maximumf %5, %6 : vector<8x32xf32>
    %8 = arith.truncf %7 : vector<8x32xf32> to vector<8x32xbf16>
    %c0_6 = arith.constant 0 : index
    %c0_7 = arith.constant 0 : index
    %9 = vector.load %arg4[%c0_6, %c0_7] : memref<32x32xbf16, #tpu.memory_space<vmem>>, vector<32x32xbf16>
    %cst_8 = arith.constant dense<0.000000e+00> : vector<8x32xf32>
    %10 = tpu.matmul %8, %9, %cst_8 {dimension_numbers = #tpu.dot_dimension_numbers<[1], [0], [0], [1], [0, 0, 1, 1], [], []>} : vector<8x32xbf16>, vector<32x32xbf16>, vector<8x32xf32> -> vector<8x32xf32>
    %c0_9 = arith.constant 0 : index
    %c0_10 = arith.constant 0 : index
    %11 = vector.load %arg5[%c0_9, %c0_10] : memref<1x32xf32, #tpu.memory_space<vmem>>, vector<1x32xf32>
    %12 = vector.broadcast %11 : vector<1x32xf32> to vector<8x32xf32>
    %13 = arith.addf %10, %12 : vector<8x32xf32>
    %cst_11 = arith.constant 0.000000e+00 : f32
    %14 = vector.broadcast %cst_11 : f32 to vector<8x32xf32>
    %15 = arith.maximumf %13, %14 : vector<8x32xf32>
    %16 = arith.truncf %15 : vector<8x32xf32> to vector<8x32xbf16>
    %c0_12 = arith.constant 0 : index
    %c0_13 = arith.constant 0 : index
    %17 = vector.load %arg6[%c0_12, %c0_13] : memref<32x24xbf16, #tpu.memory_space<vmem>>, vector<32x24xbf16>
    %cst_14 = arith.constant dense<0.000000e+00> : vector<8x24xf32>
    %18 = tpu.matmul %16, %17, %cst_14 {dimension_numbers = #tpu.dot_dimension_numbers<[1], [0], [0], [1], [0, 0, 1, 1], [], []>} : vector<8x32xbf16>, vector<32x24xbf16>, vector<8x24xf32> -> vector<8x24xf32>
    %c0_15 = arith.constant 0 : index
    %c0_16 = arith.constant 0 : index
    %19 = vector.load %arg7[%c0_15, %c0_16] : memref<1x24xf32, #tpu.memory_space<vmem>>, vector<1x24xf32>
    %20 = vector.broadcast %19 : vector<1x24xf32> to vector<8x24xf32>
    %21 = arith.addf %18, %20 : vector<8x24xf32>
    %c0_17 = arith.constant 0 : index
    %c0_18 = arith.constant 0 : index
    %22 = vector.load %arg8[%c0_17, %c0_18] : memref<8x24xf32, #tpu.memory_space<vmem>>, vector<8x24xf32>
    tpu.vector_store %arg8[%c0_17, %c0_18], %21 {strides = array<i32>} : memref<8x24xf32, #tpu.memory_space<vmem>>, vector<8x24xf32>,
    return
  }
  func.func @transform_0(%arg0: i32) -> (i32, i32) {
    %c0_i32 = arith.constant 0 : i32
    %c0_i32_0 = arith.constant 0 : i32
    return %arg0, %c0_i32 : i32, i32
  }
  func.func @transform_1(%arg0: i32) -> (i32, i32) {
    %c0_i32 = arith.constant 0 : i32
    %c0_i32_0 = arith.constant 0 : i32
    %c0_i32_1 = arith.constant 0 : i32
    return %c0_i32, %c0_i32_0 : i32, i32
  }
  func.func @transform_2(%arg0: i32) -> (i32, i32) {
    %c0_i32 = arith.constant 0 : i32
    %c0_i32_0 = arith.constant 0 : i32
    %c0_i32_1 = arith.constant 0 : i32
    return %c0_i32, %c0_i32_0 : i32, i32
  }
  func.func @transform_3(%arg0: i32) -> (i32, i32) {
    %c0_i32 = arith.constant 0 : i32
    %c0_i32_0 = arith.constant 0 : i32
    %c0_i32_1 = arith.constant 0 : i32
    return %c0_i32, %c0_i32_0 : i32, i32
  }
  func.func @transform_4(%arg0: i32) -> (i32, i32) {
    %c0_i32 = arith.constant 0 : i32
    %c0_i32_0 = arith.constant 0 : i32
    %c0_i32_1 = arith.constant 0 : i32
    return %c0_i32, %c0_i32_0 : i32, i32
  }
  func.func @transform_5(%arg0: i32) -> (i32, i32) {
    %c0_i32 = arith.constant 0 : i32
    %c0_i32_0 = arith.constant 0 : i32
    %c0_i32_1 = arith.constant 0 : i32
    return %c0_i32, %c0_i32_0 : i32, i32
  }
  func.func @transform_6(%arg0: i32) -> (i32, i32) {
    %c0_i32 = arith.constant 0 : i32
    %c0_i32_0 = arith.constant 0 : i32
    %c0_i32_1 = arith.constant 0 : i32
    return %c0_i32, %c0_i32_0 : i32, i32
  }
  func.func @transform_7(%arg0: i32) -> (i32, i32) {
    %c0_i32 = arith.constant 0 : i32
    %c0_i32_0 = arith.constant 0 : i32
    return %arg0, %c0_i32 : i32, i32
  }
}

</mosaic_0001>

<llo_original>
// kernel: observation_model_forward.1
$region0: #{observation_model_forward.1}
  #allocation0 [shape = 'u32[]', space=smem, size = 0x4, offset = 0x4, fixed_abs, tag = 'smem constant byte address 0x4 - core index']
  #allocation1 [shape = 'u32[144,128]{1,0:T(1,128)}', space=vmem, size = 0x12000, scoped, tag = 'internal scratch']
  %s0 = inlined_call_operand.vmem [shape: bf16[8,16], index: 0, kind: input, shape index: {}]
  %s1 = inlined_call_operand.vmem [shape: bf16[16,32], index: 1, kind: input, shape index: {}]
  %s2 = inlined_call_operand.vmem [shape: f32[1,32], index: 2, kind: input, shape index: {}]
  %s3 = inlined_call_operand.vmem [shape: bf16[32,32], index: 3, kind: input, shape index: {}]
  %s4 = inlined_call_operand.vmem [shape: f32[1,32], index: 4, kind: input, shape index: {}]
  %s5 = inlined_call_operand.vmem [shape: bf16[32,24], index: 5, kind: input, shape index: {}]
  %s6 = inlined_call_operand.vmem [shape: f32[1,24], index: 6, kind: input, shape index: {}]
  %s7 = inlined_call_operand.hbm [shape: f32[8,24], index: 7, kind: output, shape index: {}]
  %s8 = sld [smem:[#allocation0]]
  $region38: #{observation_model_forward.1} parent=0
    _
  %s10 = ssub.s32 1, %s8
  %s11 = scalar_select 0, %s10, %s8
  $region1: #{observation_model_forward.1} parent=0
    #allocation2 [shape = 'u8[4096]{0}', space=vmem, size = 0x1000, scoped, tag = 'output window, operand 0, single buffered']
    #allocation3 [shape = 's32[1]{0}', space=sflag, size = 0x4, scoped, tag = 'scoped memory for observation_model_forward.1']
    %12 = vsyncpa [#allocation3], 0
    // Predicated region
    $region2: #{observation_model_forward.1} parent=1 // pred_check
      _
    $region3: #{observation_model_forward.1} parent=1 // pred_check_branch
      %14 = sbr.rel (0) target = $region5
    $region4: #{observation_model_forward.1} parent=1 // pred_region
      _
    $region5: #{observation_model_forward.1} parent=1 // pred_fallthru
      _
    // Predicated region
    $region6: #{observation_model_forward.1} parent=1 // pred_check
      _
    $region7: #{observation_model_forward.1} parent=1 // pred_check_branch
      %16 = sbr.rel (0) target = $region9
    $region8: #{observation_model_forward.1} parent=1 // pred_region
      _
    $region9: #{observation_model_forward.1} parent=1 // pred_fallthru
      _
    // Predicated region
    $region10: #{observation_model_forward.1} parent=1 // pred_check
      _
    $region11: #{observation_model_forward.1} parent=1 // pred_check_branch
      %18 = sbr.rel (0) target = $region13
    $region12: #{observation_model_forward.1} parent=1 // pred_region
      _
    $region13: #{observation_model_forward.1} parent=1 // pred_fallthru
      _
    // Predicated region
    $region14: #{observation_model_forward.1} parent=1 // pred_check
      _
    $region15: #{observation_model_forward.1} parent=1 // pred_check_branch
      %20 = sbr.rel (0) target = $region17
    $region16: #{observation_model_forward.1} parent=1 // pred_region
      _
    $region17: #{observation_model_forward.1} parent=1 // pred_fallthru
      _
    // Predicated region
    $region18: #{observation_model_forward.1} parent=1 // pred_check
      _
    $region19: #{observation_model_forward.1} parent=1 // pred_check_branch
      %22 = sbr.rel (0) target = $region21
    $region20: #{observation_model_forward.1} parent=1 // pred_region
      _
    $region21: #{observation_model_forward.1} parent=1 // pred_fallthru
      _
    // Predicated region
    $region22: #{observation_model_forward.1} parent=1 // pred_check
      _
    $region23: #{observation_model_forward.1} parent=1 // pred_check_branch
      %24 = sbr.rel (0) target = $region25
    $region24: #{observation_model_forward.1} parent=1 // pred_region
      _
    $region25: #{observation_model_forward.1} parent=1 // pred_fallthru
      _
    // Predicated region
    $region26: #{observation_model_forward.1} parent=1 // pred_check
      _
    $region27: #{observation_model_forward.1} parent=1 // pred_check_branch
      %26 = sbr.rel (0) target = $region29
    $region28: #{observation_model_forward.1} parent=1 // pred_region
      _
    $region29: #{observation_model_forward.1} parent=1 // pred_fallthru
      _
    %v28 = vld [vmem:[%s0] sm:$0xf]
    %v29 = vld [vmem:[%s1] sm:$0xf]
    %v30 = vld [vmem:[%s1 + $0x4] sm:$0xf]
    %v31 = vld [vmem:[%s2] sm:$0x1]
    %v33 = vlaneseq
    %v34 = vshrl.u32 %v33, 7
    %v35 = vsub.s32 0, %v34
    %v36 = vrot.slane %v31, %v35
    %v40 = vunpack.c.l.b16 %v29
    %v41 = vunpack.c.l.b16 %v30
    %v42 = vpack.c.b16 %v41, %v40
    %vm44 = vcmask 130048
    %v46 = vsel %vm44, %v28, 0
    %48 = vmatprep.subr.bf16.mxu0 0
    %49 = vmatpush1.bf16.msra.mxu0 %v42
    %50 = vmatprep.subr.bf16.mxu0 0
    %51 = vmatpush1.bf16.msra.mxu0 0
    %52 = vmatprep.subr.bf16.mxu0 0
    %53 = vmatpush1.bf16.msra.mxu0 0
    %54 = vmatprep.subr.bf16.mxu0 0
    %55 = vmatpush1.bf16.msra.mxu0 0
    %56 = vmatprep.subr.bf16.mxu0 0
    %57 = vmatpush1.bf16.msra.mxu0 0
    %58 = vmatprep.subr.bf16.mxu0 0
    %59 = vmatpush1.bf16.msra.mxu0 0
    %60 = vmatprep.subr.bf16.mxu0 0
    %61 = vmatpush1.bf16.msra.mxu0 0
    %62 = vmatprep.subr.bf16.mxu0 0
    %63 = vmatpush1.bf16.msra.mxu0 0
    %64 = vmatprep.subr.bf16.mxu0 0
    %65 = vmatpush1.bf16.msra.mxu0 0
    %66 = vmatprep.subr.bf16.mxu0 0
    %67 = vmatpush1.bf16.msra.mxu0 0
    %68 = vmatprep.subr.bf16.mxu0 0
    %69 = vmatpush1.bf16.msra.mxu0 0
    %70 = vmatprep.subr.bf16.mxu0 0
    %71 = vmatpush1.bf16.msra.mxu0 0
    %72 = vmatprep.subr.bf16.mxu0 0
    %73 = vmatpush1.bf16.msra.mxu0 0
    %74 = vmatprep.subr.bf16.mxu0 0
    %75 = vmatpush1.bf16.msra.mxu0 0
    %76 = vmatprep.subr.bf16.mxu0 0
    %77 = vmatpush1.bf16.msra.mxu0 0
    %78 = vmatprep.subr.bf16.mxu0 0
    %79 = vmatpush1.bf16.msra.mxu0 0
    %80 = vmatprep.mubr.bf16.mxu0 0
    %81 = vmatmul.mubr.bf16.gmra.mrb[0].mxu0 %v46
    %v82 = vpop.f32.mrb[0].mxu0
    %v83 = vadd.f32 %v36, %v82
    %v84 = vpop.f32.mrb[0].mxu0
    %v85 = vpop.f32.mrb[0].mxu0
    %v86 = vpop.f32.mrb[0].mxu0
    %87 = vdwg.mxu0
    %v88 = vmax.f32 %v83, 0.0
    %v89 = vpack.c.bf16 %v88, %v88
    %v90 = vld [vmem:[%s3] sm:$0xf]
    %v91 = vld [vmem:[%s3 + $0x4] sm:$0xf]
    %v92 = vld [vmem:[%s3 + $0x8] sm:$0xf]
    %v93 = vld [vmem:[%s3 + $0xc] sm:$0xf]
    %v94 = vld [vmem:[%s4] sm:$0x1]
    %v96 = vlaneseq
    %v97 = vshrl.u32 %v96, 7
    %v98 = vsub.s32 0, %v97
    %v99 = vrot.slane %v94, %v98
    %v105 = vunpack.c.l.b16 %v90
    %v106 = vunpack.c.l.b16 %v91
    %v107 = vunpack.c.l.b16 %v92
    %v108 = vunpack.c.l.b16 %v93
    %v109 = vpack.c.b16 %v106, %v105
    %v110 = vpack.c.b16 %v108, %v107
    %vm113 = vcmask 261120
    %v115 = vsel %vm113, %v89, 0
    %117 = vmatprep.subr.bf16.mxu0 0
    %118 = vmatpush1.bf16.msra.mxu0 %v109
    %119 = vmatprep.subr.bf16.mxu0 0
    %120 = vmatpush1.bf16.msra.mxu0 %v110
    %121 = vmatprep.subr.bf16.mxu0 0
    %122 = vmatpush1.bf16.msra.mxu0 0
    %123 = vmatprep.subr.bf16.mxu0 0
    %124 = vmatpush1.bf16.msra.mxu0 0
    %125 = vmatprep.subr.bf16.mxu0 0
    %126 = vmatpush1.bf16.msra.mxu0 0
    %127 = vmatprep.subr.bf16.mxu0 0
    %128 = vmatpush1.bf16.msra.mxu0 0
    %129 = vmatprep.subr.bf16.mxu0 0
    %130 = vmatpush1.bf16.msra.mxu0 0
    %131 = vmatprep.subr.bf16.mxu0 0
    %132 = vmatpush1.bf16.msra.mxu0 0
    %133 = vmatprep.subr.bf16.mxu0 0
    %134 = vmatpush1.bf16.msra.mxu0 0
    %135 = vmatprep.subr.bf16.mxu0 0
    %136 = vmatpush1.bf16.msra.mxu0 0
    %137 = vmatprep.subr.bf16.mxu0 0
    %138 = vmatpush1.bf16.msra.mxu0 0
    %139 = vmatprep.subr.bf16.mxu0 0
    %140 = vmatpush1.bf16.msra.mxu0 0
    %141 = vmatprep.subr.bf16.mxu0 0
    %142 = vmatpush1.bf16.msra.mxu0 0
    %143 = vmatprep.subr.bf16.mxu0 0
    %144 = vmatpush1.bf16.msra.mxu0 0
    %145 = vmatprep.subr.bf16.mxu0 0
    %146 = vmatpush1.bf16.msra.mxu0 0
    %147 = vmatprep.subr.bf16.mxu0 0
    %148 = vmatpush1.bf16.msra.mxu0 0
    %149 = vmatprep.mubr.bf16.mxu0 0
    %150 = vmatmul.mubr.bf16.gmra.mrb[0].mxu0 %v115
    %v151 = vpop.f32.mrb[0].mxu0
    %v152 = vadd.f32 %v99, %v151
    %v153 = vpop.f32.mrb[0].mxu0
    %v154 = vpop.f32.mrb[0].mxu0
    %v155 = vpop.f32.mrb[0].mxu0
    %156 = vdwg.mxu0
    %v157 = vmax.f32 %v152, 0.0
    %v158 = vpack.c.bf16 %v157, %v157
    %v159 = vld [vmem:[%s5] sm:$0xf]
    %v160 = vld [vmem:[%s5 + $0x4] sm:$0xf]
    %v161 = vld [vmem:[%s5 + $0x8] sm:$0xf]
    %v162 = vld [vmem:[%s5 + $0xc] sm:$0xf]
    %v163 = vld [vmem:[%s6] sm:$0x1]
    %v165 = vlaneseq
    %v166 = vshrl.u32 %v165, 7
    %v167 = vsub.s32 0, %v166
    %v168 = vrot.slane %v163, %v167
    %v174 = vunpack.c.l.b16 %v159
    %v175 = vunpack.c.l.b16 %v160
    %v176 = vunpack.c.l.b16 %v161
    %v177 = vunpack.c.l.b16 %v162
    %v178 = vpack.c.b16 %v175, %v174
    %v179 = vpack.c.b16 %v177, %v176
    %v183 = vsel %vm113, %v158, 0
    %185 = vmatprep.subr.bf16.mxu0 0
    %186 = vmatpush1.bf16.msra.mxu0 %v178
    %187 = vmatprep.subr.bf16.mxu0 0
    %188 = vmatpush1.bf16.msra.mxu0 %v179
    %189 = vmatprep.subr.bf16.mxu0 0
    %190 = vmatpush1.bf16.msra.mxu0 0
    %191 = vmatprep.subr.bf16.mxu0 0
    %192 = vmatpush1.bf16.msra.mxu0 0
    %193 = vmatprep.subr.bf16.mxu0 0
    %194 = vmatpush1.bf16.msra.mxu0 0
    %195 = vmatprep.subr.bf16.mxu0 0
    %196 = vmatpush1.bf16.msra.mxu0 0
    %197 = vmatprep.subr.bf16.mxu0 0
    %198 = vmatpush1.bf16.msra.mxu0 0
    %199 = vmatprep.subr.bf16.mxu0 0
    %200 = vmatpush1.bf16.msra.mxu0 0
    %201 = vmatprep.subr.bf16.mxu0 0
    %202 = vmatpush1.bf16.msra.mxu0 0
    %203 = vmatprep.subr.bf16.mxu0 0
    %204 = vmatpush1.bf16.msra.mxu0 0
    %205 = vmatprep.subr.bf16.mxu0 0
    %206 = vmatpush1.bf16.msra.mxu0 0
    %207 = vmatprep.subr.bf16.mxu0 0
    %208 = vmatpush1.bf16.msra.mxu0 0
    %209 = vmatprep.subr.bf16.mxu0 0
    %210 = vmatpush1.bf16.msra.mxu0 0
    %211 = vmatprep.subr.bf16.mxu0 0
    %212 = vmatpush1.bf16.msra.mxu0 0
    %213 = vmatprep.subr.bf16.mxu0 0
    %214 = vmatpush1.bf16.msra.mxu0 0
    %215 = vmatprep.subr.bf16.mxu0 0
    %216 = vmatpush1.bf16.msra.mxu0 0
    %217 = vmatprep.mubr.bf16.mxu0 0
    %218 = vmatmul.mubr.bf16.gmra.mrb[0].mxu0 %v183
    %v219 = vpop.f32.mrb[0].mxu0
    %v220 = vadd.f32 %v168, %v219
    %v221 = vpop.f32.mrb[0].mxu0
    %v222 = vpop.f32.mrb[0].mxu0
    %v223 = vpop.f32.mrb[0].mxu0
    %224 = vdwg.mxu0
    %vm225 = vcmask 195584
    %226 = vst.msk [vmem:[#allocation2] sm:$0xff] %vm225, %v220
    // Predicated region
    $region30: #{observation_model_forward.1} parent=1 // pred_check
      _
    $region31: #{observation_model_forward.1} parent=1 // pred_check_branch
      %228 = sbr.rel (0) target = $region33
    $region32: #{observation_model_forward.1} parent=1 // pred_region
      %s230 = ssub.s32 128, 128
      %231 = vsyncadd [#allocation3], %s230
      %s233 = sshll.u32 [#allocation2], 4
      %s234 = int_to_ptr.vmem [resolvable:$true] %s233
      %236 = dma.vmem_to_hbm [thread:$0]  %s234, 128, %s7, [#allocation3]
    $region33: #{observation_model_forward.1} parent=1 // pred_fallthru
      _
    // Predicated region
    $region34: #{observation_model_forward.1} parent=1 // pred_check
      _
    $region35: #{observation_model_forward.1} parent=1 // pred_check_branch
      %238 = sbr.rel (0) target = $region37
    $region36: #{observation_model_forward.1} parent=1 // pred_region
      %239 = dma.done [#allocation3], 128
    $region37: #{observation_model_forward.1} parent=1 // pred_fallthru
      _
    %240 = vsyncpa [#allocation3], 1

</llo_original>
